<compile_context>
chip_gen: v7x
topology: tpu7x:2x2x1
jax: 0.10.0
libtpu: 0.0.40
codegen_flags: <defaults>
</compile_context>

<pallas_src>
import functools

import jax
import jax.numpy as jnp
from jax.experimental import pallas as pl
from jax.experimental.pallas import tpu as pltpu

# Padded (vreg-friendly) widths used inside the kernel.
_F_IN = 1024   # 1000 -> 1024  (feature / W1-K axis)
_H1 = 256      # 250  -> 256   (W1-N / W2-K axis)
_H2 = 128      # 50   -> 128   (W2-N / W3-K axis)
_F_OUT = 128   # 3    -> 128   (lane-dense output; sliced to 3 in wrapper)


def _round_up(x, m):
    return (x + m - 1) // m * m


def _mlp_kernel(x_ref, w1_ref, b1_ref, w2_ref, b2_ref, w3_ref, b3_ref, o_ref):
    # ReLU on the pretrained features (first layer of final_layer).
    h0 = jnp.maximum(x_ref[...], 0.0)                      # f32 [TB, 1024]
    # TODO(synk): Dropout(p=0.5) omitted — identity in eval mode.

    # Linear(1000 -> 250) + ReLU.  Weights arrive as bf16 (HBM win); they are
    # widened in-register and the dot accumulates in f32.
    h1 = jnp.dot(h0, w1_ref[...].astype(jnp.float32),
                 preferred_element_type=jnp.float32) + b1_ref[...]
    h1 = jnp.maximum(h1, 0.0)

    # Linear(250 -> 50) + ReLU
    h2 = jnp.dot(h1, w2_ref[...].astype(jnp.float32),
                 preferred_element_type=jnp.float32) + b2_ref[...]
    h2 = jnp.maximum(h2, 0.0)

    # Linear(50 -> 3) — stored lane-dense into the 128-wide padded output.
    o_ref[...] = jnp.dot(h2, w3_ref[...].astype(jnp.float32),
                         preferred_element_type=jnp.float32) + b3_ref[...]


def _pad2(a, rows, cols):
    return jnp.pad(a, ((0, rows - a.shape[0]), (0, cols - a.shape[1])))


@functools.partial(jax.jit, static_argnames=("block_b",))
def shape_predictor_head(features, params, *, block_b=512):
    """Pallas implementation of ShapePredictor.final_layer (eval mode).

    features: [B, 1000] float32
    params:   dict with w1 [1000,250], b1 [250], w2 [250,50], b2 [50],
              w3 [50,3], b3 [3]   (already transposed to [in, out]).
    returns:  [B, 3] float32
    """
    B, F = features.shape
    assert F == 1000, F

    # Kernel-ready weights: zero-pad to lane multiples, cast to bf16.
    w1 = _pad2(params["w1"], _F_IN, _H1).astype(jnp.bfloat16)
    w2 = _pad2(params["w2"], _H1, _H2).astype(jnp.bfloat16)
    w3 = _pad2(params["w3"], _H2, _F_OUT).astype(jnp.bfloat16)
    b1 = jnp.pad(params["b1"], (0, _H1 - params["b1"].shape[0])).reshape(1, _H1)
    b2 = jnp.pad(params["b2"], (0, _H2 - params["b2"].shape[0])).reshape(1, _H2)
    b3 = jnp.pad(params["b3"], (0, _F_OUT - params["b3"].shape[0])).reshape(1, _F_OUT)

    # Batch tiling: TB sized well under the 32 MiB scoped VMEM default even on
    # v7x (double-buffered (512,1024) f32 tiles ~4 MiB + <1 MiB weights).
    tb = min(block_b, _round_up(B, 8))
    bp = _round_up(B, tb)
    feats = jnp.pad(features, ((0, bp - B), (0, _F_IN - F)))

    grid = (bp // tb,)
    resident = lambda a: pl.BlockSpec(a.shape, lambda i: (0, 0))  # weight stays in VMEM

    flops = 2 * bp * (_F_IN * _H1 + _H1 * _H2 + _H2 * _F_OUT)
    bytes_accessed = (feats.size * 4
                      + (w1.size + w2.size + w3.size) * 2
                      + (b1.size + b2.size + b3.size) * 4
                      + bp * _F_OUT * 4)

    out = pl.pallas_call(
        _mlp_kernel,
        out_shape=jax.ShapeDtypeStruct((bp, _F_OUT), jnp.float32),
        grid=grid,
        in_specs=[
            pl.BlockSpec((tb, _F_IN), lambda i: (i, 0)),
            resident(w1), resident(b1),
            resident(w2), resident(b2),
            resident(w3), resident(b3),
        ],
        out_specs=pl.BlockSpec((tb, _F_OUT), lambda i: (i, 0)),
        compiler_params=pltpu.CompilerParams(
            dimension_semantics=("parallel",)),
        cost_estimate=pl.CostEstimate(
            flops=flops, transcendentals=0, bytes_accessed=bytes_accessed),
    )(feats, w1, b1, w2, b2, w3, b3)

    return out[:B, :3]


def make_params(key):
    """Deterministic parameter init matching nn.Linear shapes (pre-transposed)."""
    ks = jax.random.split(key, 6)

    def linear(kw, kb, fan_in, fan_out):
        bound = 1.0 / jnp.sqrt(fan_in)
        # PyTorch stores W as [out, in]; store transposed [in, out] for the kernel.
        w = jax.random.uniform(kw, (fan_in, fan_out), jnp.float32, -bound, bound)
        b = jax.random.uniform(kb, (fan_out,), jnp.float32, -bound, bound)
        return w, b

    w1, b1 = linear(ks[0], ks[1], 1000, 250)
    w2, b2 = linear(ks[2], ks[3], 250, 50)
    w3, b3 = linear(ks[4], ks[5], 50, 3)
    return {"w1": w1, "b1": b1, "w2": w2, "b2": b2, "w3": w3, "b3": b3}


def fake_pretrained_model(image_nchw, key):
    """Stand-in for the external `pretrained_model_` argument (plain-JAX glue).

    Maps NCHW image [B, C, H, W] -> [B, 1000] via a deterministic linear
    projection of the flattened pixels."""
    B = image_nchw.shape[0]
    flat = image_nchw.reshape(B, -1)
    proj = jax.random.normal(key, (flat.shape[1], 1000), jnp.float32) * 0.02
    return flat @ proj


def reference_head(features, params):
    """Pure-JAX reference of final_layer (eval mode), using the same
    bf16-quantized weights the kernel sees so the comparison is apples-to-apples."""
    q = lambda w: w.astype(jnp.bfloat16).astype(jnp.float32)
    hi = jax.lax.Precision.HIGHEST
    h = jnp.maximum(features, 0.0)
    h = jnp.maximum(jnp.dot(h, q(params["w1"]), precision=hi) + params["b1"], 0.0)
    h = jnp.maximum(jnp.dot(h, q(params["w2"]), precision=hi) + params["b2"], 0.0)
    return jnp.dot(h, q(params["w3"]), precision=hi) + params["b3"]


if __name__ == "__main__":
    key = jax.random.PRNGKey(0)
    k_img, k_params, k_backbone = jax.random.split(key, 3)

    # Small NCHW image input (batch=2, channels=3, spatial=16).
    image = jax.random.normal(k_img, (2, 3, 16, 16), jnp.float32)

    params = make_params(k_params)

    # "pretrained_model_(image_)" -> [B, 1000] features (glue, outside kernel).
    features = fake_pretrained_model(image, k_backbone)

    out = shape_predictor_head(features, params)
    out = jax.block_until_ready(out)

    ref = reference_head(features, params)
    assert out.shape == (2, 3), out.shape
    assert jnp.allclose(out, ref, atol=2e-3, rtol=2e-3), "mismatch vs reference"

    print("KERNEL_OK")
</pallas_src>

<mosaic_0001>
module attributes {stable_mosaic.version = 11 : i64} {
  func.func @_mlp_kernel(%arg0: i32, %arg1: memref<8x1024xf32, #tpu.memory_space<vmem>>, %arg2: memref<1024x256xbf16, #tpu.memory_space<vmem>>, %arg3: memref<1x256xf32, #tpu.memory_space<vmem>>, %arg4: memref<256x128xbf16, #tpu.memory_space<vmem>>, %arg5: memref<1x128xf32, #tpu.memory_space<vmem>>, %arg6: memref<128x128xbf16, #tpu.memory_space<vmem>>, %arg7: memref<1x128xf32, #tpu.memory_space<vmem>>, %arg8: memref<8x128xf32, #tpu.memory_space<vmem>>) attributes {dimension_semantics = [#tpu.dimension_semantics<parallel>], iteration_bounds = array<i64: 1>, scalar_prefetch = 0 : i64, scratch_operands = 0 : i64, tpu.core_type = #tpu.core_type<tc>, window_params = [{transform_indices = @transform_0, window_bounds = array<i64: 8, 1024>}, {pipeline_mode = #tpu.pipeline_mode<synchronous>, transform_indices = @transform_1, window_bounds = array<i64: 1024, 256>}, {pipeline_mode = #tpu.pipeline_mode<synchronous>, transform_indices = @transform_2, window_bounds = array<i64: 1, 256>}, {pipeline_mode = #tpu.pipeline_mode<synchronous>, transform_indices = @transform_3, window_bounds = array<i64: 256, 128>}, {pipeline_mode = #tpu.pipeline_mode<synchronous>, transform_indices = @transform_4, window_bounds = array<i64: 1, 128>}, {pipeline_mode = #tpu.pipeline_mode<synchronous>, transform_indices = @transform_5, window_bounds = array<i64: 128, 128>}, {pipeline_mode = #tpu.pipeline_mode<synchronous>, transform_indices = @transform_6, window_bounds = array<i64: 1, 128>}, {transform_indices = @transform_7, window_bounds = array<i64: 8, 128>}]} {
    %c0 = arith.constant 0 : index
    %c0_0 = arith.constant 0 : index
    %0 = vector.load %arg1[%c0, %c0_0] : memref<8x1024xf32, #tpu.memory_space<vmem>>, vector<8x1024xf32>
    %cst = arith.constant 0.000000e+00 : f32
    %1 = vector.broadcast %cst : f32 to vector<8x1024xf32>
    %2 = arith.maximumf %0, %1 : vector<8x1024xf32>
    %c0_1 = arith.constant 0 : index
    %c0_2 = arith.constant 0 : index
    %3 = vector.load %arg2[%c0_1, %c0_2] : memref<1024x256xbf16, #tpu.memory_space<vmem>>, vector<1024x256xbf16>
    %4 = arith.extf %3 : vector<1024x256xbf16> to vector<1024x256xf32>
    %cst_3 = arith.constant dense<0.000000e+00> : vector<8x256xf32>
    %5 = tpu.matmul %2, %4, %cst_3 {dimension_numbers = #tpu.dot_dimension_numbers<[1], [0], [0], [1], [0, 0, 1, 1], [], []>} : vector<8x1024xf32>, vector<1024x256xf32>, vector<8x256xf32> -> vector<8x256xf32>
    %c0_4 = arith.constant 0 : index
    %c0_5 = arith.constant 0 : index
    %6 = vector.load %arg3[%c0_4, %c0_5] : memref<1x256xf32, #tpu.memory_space<vmem>>, vector<1x256xf32>
    %7 = vector.broadcast %6 : vector<1x256xf32> to vector<8x256xf32>
    %8 = arith.addf %5, %7 : vector<8x256xf32>
    %cst_6 = arith.constant 0.000000e+00 : f32
    %9 = vector.broadcast %cst_6 : f32 to vector<8x256xf32>
    %10 = arith.maximumf %8, %9 : vector<8x256xf32>
    %c0_7 = arith.constant 0 : index
    %c0_8 = arith.constant 0 : index
    %11 = vector.load %arg4[%c0_7, %c0_8] : memref<256x128xbf16, #tpu.memory_space<vmem>>, vector<256x128xbf16>
    %12 = arith.extf %11 : vector<256x128xbf16> to vector<256x128xf32>
    %cst_9 = arith.constant dense<0.000000e+00> : vector<8x128xf32>
    %13 = tpu.matmul %10, %12, %cst_9 {dimension_numbers = #tpu.dot_dimension_numbers<[1], [0], [0], [1], [0, 0, 1, 1], [], []>} : vector<8x256xf32>, vector<256x128xf32>, vector<8x128xf32> -> vector<8x128xf32>
    %c0_10 = arith.constant 0 : index
    %c0_11 = arith.constant 0 : index
    %14 = vector.load %arg5[%c0_10, %c0_11] : memref<1x128xf32, #tpu.memory_space<vmem>>, vector<1x128xf32>
    %15 = vector.broadcast %14 : vector<1x128xf32> to vector<8x128xf32>
    %16 = arith.addf %13, %15 : vector<8x128xf32>
    %cst_12 = arith.constant 0.000000e+00 : f32
    %17 = vector.broadcast %cst_12 : f32 to vector<8x128xf32>
    %18 = arith.maximumf %16, %17 : vector<8x128xf32>
    %c0_13 = arith.constant 0 : index
    %c0_14 = arith.constant 0 : index
    %19 = vector.load %arg6[%c0_13, %c0_14] : memref<128x128xbf16, #tpu.memory_space<vmem>>, vector<128x128xbf16>
    %20 = arith.extf %19 : vector<128x128xbf16> to vector<128x128xf32>
    %cst_15 = arith.constant dense<0.000000e+00> : vector<8x128xf32>
    %21 = tpu.matmul %18, %20, %cst_15 {dimension_numbers = #tpu.dot_dimension_numbers<[1], [0], [0], [1], [0, 0, 1, 1], [], []>} : vector<8x128xf32>, vector<128x128xf32>, vector<8x128xf32> -> vector<8x128xf32>
    %c0_16 = arith.constant 0 : index
    %c0_17 = arith.constant 0 : index
    %22 = vector.load %arg7[%c0_16, %c0_17] : memref<1x128xf32, #tpu.memory_space<vmem>>, vector<1x128xf32>
    %23 = vector.broadcast %22 : vector<1x128xf32> to vector<8x128xf32>
    %24 = arith.addf %21, %23 : vector<8x128xf32>
    %c0_18 = arith.constant 0 : index
    %c0_19 = arith.constant 0 : index
    %25 = vector.load %arg8[%c0_18, %c0_19] : memref<8x128xf32, #tpu.memory_space<vmem>>, vector<8x128xf32>
    tpu.vector_store %arg8[%c0_18, %c0_19], %24 {strides = array<i32>} : memref<8x128xf32, #tpu.memory_space<vmem>>, vector<8x128xf32>,
    return
  }
  func.func @transform_0(%arg0: i32) -> (i32, i32) {
    %c0_i32 = arith.constant 0 : i32
    %c0_i32_0 = arith.constant 0 : i32
    return %arg0, %c0_i32 : i32, i32
  }
  func.func @transform_1(%arg0: i32) -> (i32, i32) {
    %c0_i32 = arith.constant 0 : i32
    %c0_i32_0 = arith.constant 0 : i32
    %c0_i32_1 = arith.constant 0 : i32
    return %c0_i32, %c0_i32_0 : i32, i32
  }
  func.func @transform_2(%arg0: i32) -> (i32, i32) {
    %c0_i32 = arith.constant 0 : i32
    %c0_i32_0 = arith.constant 0 : i32
    %c0_i32_1 = arith.constant 0 : i32
    return %c0_i32, %c0_i32_0 : i32, i32
  }
  func.func @transform_3(%arg0: i32) -> (i32, i32) {
    %c0_i32 = arith.constant 0 : i32
    %c0_i32_0 = arith.constant 0 : i32
    %c0_i32_1 = arith.constant 0 : i32
    return %c0_i32, %c0_i32_0 : i32, i32
  }
  func.func @transform_4(%arg0: i32) -> (i32, i32) {
    %c0_i32 = arith.constant 0 : i32
    %c0_i32_0 = arith.constant 0 : i32
    %c0_i32_1 = arith.constant 0 : i32
    return %c0_i32, %c0_i32_0 : i32, i32
  }
  func.func @transform_5(%arg0: i32) -> (i32, i32) {
    %c0_i32 = arith.constant 0 : i32
    %c0_i32_0 = arith.constant 0 : i32
    %c0_i32_1 = arith.constant 0 : i32
    return %c0_i32, %c0_i32_0 : i32, i32
  }
  func.func @transform_6(%arg0: i32) -> (i32, i32) {
    %c0_i32 = arith.constant 0 : i32
    %c0_i32_0 = arith.constant 0 : i32
    %c0_i32_1 = arith.constant 0 : i32
    return %c0_i32, %c0_i32_0 : i32, i32
  }
  func.func @transform_7(%arg0: i32) -> (i32, i32) {
    %c0_i32 = arith.constant 0 : i32
    %c0_i32_0 = arith.constant 0 : i32
    return %arg0, %c0_i32 : i32, i32
  }
}

</mosaic_0001>

<llo_original>
// kernel: shape_predictor_head.1
$region0: #{shape_predictor_head.1}
  #allocation0 [shape = 'u32[]', space=smem, size = 0x4, offset = 0x4, fixed_abs, tag = 'smem constant byte address 0x4 - core index']
  #allocation1 [shape = 'u32[144,128]{1,0:T(1,128)}', space=vmem, size = 0x12000, scoped, tag = 'internal scratch']
  %s0 = inlined_call_operand.vmem [shape: f32[8,1024], index: 0, kind: input, shape index: {}]
  %s1 = inlined_call_operand.vmem [shape: bf16[1024,256], index: 1, kind: input, shape index: {}]
  %s2 = inlined_call_operand.vmem [shape: f32[1,256], index: 2, kind: input, shape index: {}]
  %s3 = inlined_call_operand.vmem [shape: bf16[256,128], index: 3, kind: input, shape index: {}]
  %s4 = inlined_call_operand.vmem [shape: f32[1,128], index: 4, kind: input, shape index: {}]
  %s5 = inlined_call_operand.vmem [shape: bf16[128,128], index: 5, kind: input, shape index: {}]
  %s6 = inlined_call_operand.vmem [shape: f32[1,128], index: 6, kind: input, shape index: {}]
  %s7 = inlined_call_operand.vmem [shape: f32[8,128], index: 7, kind: output, shape index: {}]
  %s8 = sld [smem:[#allocation0]]
  $region38: #{shape_predictor_head.1} parent=0
    _
  %s10 = ssub.s32 1, %s8
  %s11 = scalar_select 0, %s10, %s8
  // Predicated region
  $region2: #{shape_predictor_head.1} parent=0 // pred_check
    _
  $region3: #{shape_predictor_head.1} parent=0 // pred_check_branch
    %13 = sbr.rel (0) target = $region5
  $region4: #{shape_predictor_head.1} parent=0 // pred_region
    _
  $region5: #{shape_predictor_head.1} parent=0 // pred_fallthru
    _
  // Predicated region
  $region6: #{shape_predictor_head.1} parent=0 // pred_check
    _
  $region7: #{shape_predictor_head.1} parent=0 // pred_check_branch
    %15 = sbr.rel (0) target = $region9
  $region8: #{shape_predictor_head.1} parent=0 // pred_region
    _
  $region9: #{shape_predictor_head.1} parent=0 // pred_fallthru
    _
  // Predicated region
  $region10: #{shape_predictor_head.1} parent=0 // pred_check
    _
  $region11: #{shape_predictor_head.1} parent=0 // pred_check_branch
    %17 = sbr.rel (0) target = $region13
  $region12: #{shape_predictor_head.1} parent=0 // pred_region
    _
  $region13: #{shape_predictor_head.1} parent=0 // pred_fallthru
    _
  // Predicated region
  $region14: #{shape_predictor_head.1} parent=0 // pred_check
    _
  $region15: #{shape_predictor_head.1} parent=0 // pred_check_branch
    %19 = sbr.rel (0) target = $region17
  $region16: #{shape_predictor_head.1} parent=0 // pred_region
    _
  $region17: #{shape_predictor_head.1} parent=0 // pred_fallthru
    _
  // Predicated region
  $region18: #{shape_predictor_head.1} parent=0 // pred_check
    _
  $region19: #{shape_predictor_head.1} parent=0 // pred_check_branch
    %21 = sbr.rel (0) target = $region21
  $region20: #{shape_predictor_head.1} parent=0 // pred_region
    _
  $region21: #{shape_predictor_head.1} parent=0 // pred_fallthru
    _
  // Predicated region
  $region22: #{shape_predictor_head.1} parent=0 // pred_check
    _
  $region23: #{shape_predictor_head.1} parent=0 // pred_check_branch
    %23 = sbr.rel (0) target = $region25
  $region24: #{shape_predictor_head.1} parent=0 // pred_region
    _
  $region25: #{shape_predictor_head.1} parent=0 // pred_fallthru
    _
  // Predicated region
  $region26: #{shape_predictor_head.1} parent=0 // pred_check
    _
  $region27: #{shape_predictor_head.1} parent=0 // pred_check_branch
    %25 = sbr.rel (0) target = $region29
  $region28: #{shape_predictor_head.1} parent=0 // pred_region
    _
  $region29: #{shape_predictor_head.1} parent=0 // pred_fallthru
    _
  %v26 = vld [vmem:[%s0] sm:$0xff]
  %v27 = vld [vmem:[%s0 + $0x8] sm:$0xff]
  %v28 = vld [vmem:[%s0 + $0x10] sm:$0xff]
  %v29 = vld [vmem:[%s0 + $0x18] sm:$0xff]
  %v30 = vld [vmem:[%s0 + $0x20] sm:$0xff]
  %v31 = vld [vmem:[%s0 + $0x28] sm:$0xff]
  %v32 = vld [vmem:[%s0 + $0x30] sm:$0xff]
  %v33 = vld [vmem:[%s0 + $0x38] sm:$0xff]
  %v34 = vmax.f32 %v26, 0.0
  %v35 = vmax.f32 %v27, 0.0
  %v36 = vmax.f32 %v28, 0.0
  %v37 = vmax.f32 %v29, 0.0
  %v38 = vmax.f32 %v30, 0.0
  %v39 = vmax.f32 %v31, 0.0
  %v40 = vmax.f32 %v32, 0.0
  %v41 = vmax.f32 %v33, 0.0
  %v42 = vld [vmem:[%s1] sm:$0xff]
  %v43 = vld [vmem:[%s1 + $0x8] sm:$0xff]
  %v44 = vld [vmem:[%s1 + $0x10] sm:$0xff]
  %v45 = vld [vmem:[%s1 + $0x18] sm:$0xff]
  %v46 = vld [vmem:[%s1 + $0x20] sm:$0xff]
  %v47 = vld [vmem:[%s1 + $0x28] sm:$0xff]
  %v48 = vld [vmem:[%s1 + $0x30] sm:$0xff]
  %v49 = vld [vmem:[%s1 + $0x38] sm:$0xff]
  %v50 = vld [vmem:[%s1 + $0x40] sm:$0xff]
  %v51 = vld [vmem:[%s1 + $0x48] sm:$0xff]
  %v52 = vld [vmem:[%s1 + $0x50] sm:$0xff]
  %v53 = vld [vmem:[%s1 + $0x58] sm:$0xff]
  %v54 = vld [vmem:[%s1 + $0x60] sm:$0xff]
  %v55 = vld [vmem:[%s1 + $0x68] sm:$0xff]
  %v56 = vld [vmem:[%s1 + $0x70] sm:$0xff]
  %v57 = vld [vmem:[%s1 + $0x78] sm:$0xff]
  %v58 = vld [vmem:[%s1 + $0x80] sm:$0xff]
  %v59 = vld [vmem:[%s1 + $0x88] sm:$0xff]
  %v60 = vld [vmem:[%s1 + $0x90] sm:$0xff]
  %v61 = vld [vmem:[%s1 + $0x98] sm:$0xff]
  %v62 = vld [vmem:[%s1 + $0xa0] sm:$0xff]
  %v63 = vld [vmem:[%s1 + $0xa8] sm:$0xff]
  %v64 = vld [vmem:[%s1 + $0xb0] sm:$0xff]
  %v65 = vld [vmem:[%s1 + $0xb8] sm:$0xff]
  %v66 = vld [vmem:[%s1 + $0xc0] sm:$0xff]
  %v67 = vld [vmem:[%s1 + $0xc8] sm:$0xff]
  %v68 = vld [vmem:[%s1 + $0xd0] sm:$0xff]
  %v69 = vld [vmem:[%s1 + $0xd8] sm:$0xff]
  %v70 = vld [vmem:[%s1 + $0xe0] sm:$0xff]
  %v71 = vld [vmem:[%s1 + $0xe8] sm:$0xff]
  %v72 = vld [vmem:[%s1 + $0xf0] sm:$0xff]
  %v73 = vld [vmem:[%s1 + $0xf8] sm:$0xff]
  %v74 = vld [vmem:[%s1 + $0x100] sm:$0xff]
  %v75 = vld [vmem:[%s1 + $0x108] sm:$0xff]
  %v76 = vld [vmem:[%s1 + $0x110] sm:$0xff]
  %v77 = vld [vmem:[%s1 + $0x118] sm:$0xff]
  %v78 = vld [vmem:[%s1 + $0x120] sm:$0xff]
  %v79 = vld [vmem:[%s1 + $0x128] sm:$0xff]
  %v80 = vld [vmem:[%s1 + $0x130] sm:$0xff]
  %v81 = vld [vmem:[%s1 + $0x138] sm:$0xff]
  %v82 = vld [vmem:[%s1 + $0x140] sm:$0xff]
  %v83 = vld [vmem:[%s1 + $0x148] sm:$0xff]
  %v84 = vld [vmem:[%s1 + $0x150] sm:$0xff]
  %v85 = vld [vmem:[%s1 + $0x158] sm:$0xff]
  %v86 = vld [vmem:[%s1 + $0x160] sm:$0xff]
  %v87 = vld [vmem:[%s1 + $0x168] sm:$0xff]
  %v88 = vld [vmem:[%s1 + $0x170] sm:$0xff]
  %v89 = vld [vmem:[%s1 + $0x178] sm:$0xff]
  %v90 = vld [vmem:[%s1 + $0x180] sm:$0xff]
  %v91 = vld [vmem:[%s1 + $0x188] sm:$0xff]
  %v92 = vld [vmem:[%s1 + $0x190] sm:$0xff]
  %v93 = vld [vmem:[%s1 + $0x198] sm:$0xff]
  %v94 = vld [vmem:[%s1 + $0x1a0] sm:$0xff]
  %v95 = vld [vmem:[%s1 + $0x1a8] sm:$0xff]
  %v96 = vld [vmem:[%s1 + $0x1b0] sm:$0xff]
  %v97 = vld [vmem:[%s1 + $0x1b8] sm:$0xff]
  %v98 = vld [vmem:[%s1 + $0x1c0] sm:$0xff]
  %v99 = vld [vmem:[%s1 + $0x1c8] sm:$0xff]
  %v100 = vld [vmem:[%s1 + $0x1d0] sm:$0xff]
  %v101 = vld [vmem:[%s1 + $0x1d8] sm:$0xff]
  %v102 = vld [vmem:[%s1 + $0x1e0] sm:$0xff]
  %v103 = vld [vmem:[%s1 + $0x1e8] sm:$0xff]
  %v104 = vld [vmem:[%s1 + $0x1f0] sm:$0xff]
  %v105 = vld [vmem:[%s1 + $0x1f8] sm:$0xff]
  %v106 = vld [vmem:[%s1 + $0x200] sm:$0xff]
  %v107 = vld [vmem:[%s1 + $0x208] sm:$0xff]
  %v108 = vld [vmem:[%s1 + $0x210] sm:$0xff]
  %v109 = vld [vmem:[%s1 + $0x218] sm:$0xff]
  %v110 = vld [vmem:[%s1 + $0x220] sm:$0xff]
  %v111 = vld [vmem:[%s1 + $0x228] sm:$0xff]
  %v112 = vld [vmem:[%s1 + $0x230] sm:$0xff]
  %v113 = vld [vmem:[%s1 + $0x238] sm:$0xff]
  %v114 = vld [vmem:[%s1 + $0x240] sm:$0xff]
  %v115 = vld [vmem:[%s1 + $0x248] sm:$0xff]
  %v116 = vld [vmem:[%s1 + $0x250] sm:$0xff]
  %v117 = vld [vmem:[%s1 + $0x258] sm:$0xff]
  %v118 = vld [vmem:[%s1 + $0x260] sm:$0xff]
  %v119 = vld [vmem:[%s1 + $0x268] sm:$0xff]
  %v120 = vld [vmem:[%s1 + $0x270] sm:$0xff]
  %v121 = vld [vmem:[%s1 + $0x278] sm:$0xff]
  %v122 = vld [vmem:[%s1 + $0x280] sm:$0xff]
  %v123 = vld [vmem:[%s1 + $0x288] sm:$0xff]
  %v124 = vld [vmem:[%s1 + $0x290] sm:$0xff]
  %v125 = vld [vmem:[%s1 + $0x298] sm:$0xff]
  %v126 = vld [vmem:[%s1 + $0x2a0] sm:$0xff]
  %v127 = vld [vmem:[%s1 + $0x2a8] sm:$0xff]
  %v128 = vld [vmem:[%s1 + $0x2b0] sm:$0xff]
  %v129 = vld [vmem:[%s1 + $0x2b8] sm:$0xff]
  %v130 = vld [vmem:[%s1 + $0x2c0] sm:$0xff]
  %v131 = vld [vmem:[%s1 + $0x2c8] sm:$0xff]
  %v132 = vld [vmem:[%s1 + $0x2d0] sm:$0xff]
  %v133 = vld [vmem:[%s1 + $0x2d8] sm:$0xff]
  %v134 = vld [vmem:[%s1 + $0x2e0] sm:$0xff]
  %v135 = vld [vmem:[%s1 + $0x2e8] sm:$0xff]
  %v136 = vld [vmem:[%s1 + $0x2f0] sm:$0xff]
  %v137 = vld [vmem:[%s1 + $0x2f8] sm:$0xff]
  %v138 = vld [vmem:[%s1 + $0x300] sm:$0xff]
  %v139 = vld [vmem:[%s1 + $0x308] sm:$0xff]
  %v140 = vld [vmem:[%s1 + $0x310] sm:$0xff]
  %v141 = vld [vmem:[%s1 + $0x318] sm:$0xff]
  %v142 = vld [vmem:[%s1 + $0x320] sm:$0xff]
  %v143 = vld [vmem:[%s1 + $0x328] sm:$0xff]
  %v144 = vld [vmem:[%s1 + $0x330] sm:$0xff]
  %v145 = vld [vmem:[%s1 + $0x338] sm:$0xff]
  %v146 = vld [vmem:[%s1 + $0x340] sm:$0xff]
  %v147 = vld [vmem:[%s1 + $0x348] sm:$0xff]
  %v148 = vld [vmem:[%s1 + $0x350] sm:$0xff]
  %v149 = vld [vmem:[%s1 + $0x358] sm:$0xff]
  %v150 = vld [vmem:[%s1 + $0x360] sm:$0xff]
  %v151 = vld [vmem:[%s1 + $0x368] sm:$0xff]
  %v152 = vld [vmem:[%s1 + $0x370] sm:$0xff]
  %v153 = vld [vmem:[%s1 + $0x378] sm:$0xff]
  %v154 = vld [vmem:[%s1 + $0x380] sm:$0xff]
  %v155 = vld [vmem:[%s1 + $0x388] sm:$0xff]
  %v156 = vld [vmem:[%s1 + $0x390] sm:$0xff]
  %v157 = vld [vmem:[%s1 + $0x398] sm:$0xff]
  %v158 = vld [vmem:[%s1 + $0x3a0] sm:$0xff]
  %v159 = vld [vmem:[%s1 + $0x3a8] sm:$0xff]
  %v160 = vld [vmem:[%s1 + $0x3b0] sm:$0xff]
  %v161 = vld [vmem:[%s1 + $0x3b8] sm:$0xff]
  %v162 = vld [vmem:[%s1 + $0x3c0] sm:$0xff]
  %v163 = vld [vmem:[%s1 + $0x3c8] sm:$0xff]
  %v164 = vld [vmem:[%s1 + $0x3d0] sm:$0xff]
  %v165 = vld [vmem:[%s1 + $0x3d8] sm:$0xff]
  %v166 = vld [vmem:[%s1 + $0x3e0] sm:$0xff]
  %v167 = vld [vmem:[%s1 + $0x3e8] sm:$0xff]
  %v168 = vld [vmem:[%s1 + $0x3f0] sm:$0xff]
  %v169 = vld [vmem:[%s1 + $0x3f8] sm:$0xff]
  %v170 = vunpack.c.l.bf16 %v42
  %v171 = vunpack.c.h.bf16 %v42
  %v172 = vunpack.c.l.bf16 %v43
  %v173 = vunpack.c.h.bf16 %v43
  %v174 = vunpack.c.l.bf16 %v44
  %v175 = vunpack.c.h.bf16 %v44
  %v176 = vunpack.c.l.bf16 %v45
  %v177 = vunpack.c.h.bf16 %v45
  %v178 = vunpack.c.l.bf16 %v46
  %v179 = vunpack.c.h.bf16 %v46
  %v180 = vunpack.c.l.bf16 %v47
  %v181 = vunpack.c.h.bf16 %v47
  %v182 = vunpack.c.l.bf16 %v48
  %v183 = vunpack.c.h.bf16 %v48
  %v184 = vunpack.c.l.bf16 %v49
  %v185 = vunpack.c.h.bf16 %v49
  %v186 = vunpack.c.l.bf16 %v50
  %v187 = vunpack.c.h.bf16 %v50
  %v188 = vunpack.c.l.bf16 %v51
  %v189 = vunpack.c.h.bf16 %v51
  %v190 = vunpack.c.l.bf16 %v52
  %v191 = vunpack.c.h.bf16 %v52
  %v192 = vunpack.c.l.bf16 %v53
  %v193 = vunpack.c.h.bf16 %v53
  %v194 = vunpack.c.l.bf16 %v54
  %v195 = vunpack.c.h.bf16 %v54
  %v196 = vunpack.c.l.bf16 %v55
  %v197 = vunpack.c.h.bf16 %v55
  %v198 = vunpack.c.l.bf16 %v56
  %v199 = vunpack.c.h.bf16 %v56
  %v200 = vunpack.c.l.bf16 %v57
  %v201 = vunpack.c.h.bf16 %v57
  %v202 = vunpack.c.l.bf16 %v58
  %v203 = vunpack.c.h.bf16 %v58
  %v204 = vunpack.c.l.bf16 %v59
  %v205 = vunpack.c.h.bf16 %v59
  %v206 = vunpack.c.l.bf16 %v60
  %v207 = vunpack.c.h.bf16 %v60
  %v208 = vunpack.c.l.bf16 %v61
  %v209 = vunpack.c.h.bf16 %v61
  %v210 = vunpack.c.l.bf16 %v62
  %v211 = vunpack.c.h.bf16 %v62
  %v212 = vunpack.c.l.bf16 %v63
  %v213 = vunpack.c.h.bf16 %v63
  %v214 = vunpack.c.l.bf16 %v64
  %v215 = vunpack.c.h.bf16 %v64
  %v216 = vunpack.c.l.bf16 %v65
  %v217 = vunpack.c.h.bf16 %v65
  %v218 = vunpack.c.l.bf16 %v66
  %v219 = vunpack.c.h.bf16 %v66
  %v220 = vunpack.c.l.bf16 %v67
  %v221 = vunpack.c.h.bf16 %v67
  %v222 = vunpack.c.l.bf16 %v68
  %v223 = vunpack.c.h.bf16 %v68
  %v224 = vunpack.c.l.bf16 %v69
  %v225 = vunpack.c.h.bf16 %v69
  %v226 = vunpack.c.l.bf16 %v70
  %v227 = vunpack.c.h.bf16 %v70
  %v228 = vunpack.c.l.bf16 %v71
  %v229 = vunpack.c.h.bf16 %v71
  %v230 = vunpack.c.l.bf16 %v72
  %v231 = vunpack.c.h.bf16 %v72
  %v232 = vunpack.c.l.bf16 %v73
  %v233 = vunpack.c.h.bf16 %v73
  %v234 = vunpack.c.l.bf16 %v74
  %v235 = vunpack.c.h.bf16 %v74
  %v236 = vunpack.c.l.bf16 %v75
  %v237 = vunpack.c.h.bf16 %v75
  %v238 = vunpack.c.l.bf16 %v76
  %v239 = vunpack.c.h.bf16 %v76
  %v240 = vunpack.c.l.bf16 %v77
  %v241 = vunpack.c.h.bf16 %v77
  %v242 = vunpack.c.l.bf16 %v78
  %v243 = vunpack.c.h.bf16 %v78
  %v244 = vunpack.c.l.bf16 %v79
  %v245 = vunpack.c.h.bf16 %v79
  %v246 = vunpack.c.l.bf16 %v80
  %v247 = vunpack.c.h.bf16 %v80
  %v248 = vunpack.c.l.bf16 %v81
  %v249 = vunpack.c.h.bf16 %v81
  %v250 = vunpack.c.l.bf16 %v82
  %v251 = vunpack.c.h.bf16 %v82
  %v252 = vunpack.c.l.bf16 %v83
  %v253 = vunpack.c.h.bf16 %v83
  %v254 = vunpack.c.l.bf16 %v84
  %v255 = vunpack.c.h.bf16 %v84
  %v256 = vunpack.c.l.bf16 %v85
  %v257 = vunpack.c.h.bf16 %v85
  %v258 = vunpack.c.l.bf16 %v86
  %v259 = vunpack.c.h.bf16 %v86
  %v260 = vunpack.c.l.bf16 %v87
  %v261 = vunpack.c.h.bf16 %v87
  %v262 = vunpack.c.l.bf16 %v88
  %v263 = vunpack.c.h.bf16 %v88
  %v264 = vunpack.c.l.bf16 %v89
  %v265 = vunpack.c.h.bf16 %v89
  %v266 = vunpack.c.l.bf16 %v90
  %v267 = vunpack.c.h.bf16 %v90
  %v268 = vunpack.c.l.bf16 %v91
  %v269 = vunpack.c.h.bf16 %v91
  %v270 = vunpack.c.l.bf16 %v92
  %v271 = vunpack.c.h.bf16 %v92
  %v272 = vunpack.c.l.bf16 %v93
  %v273 = vunpack.c.h.bf16 %v93
  %v274 = vunpack.c.l.bf16 %v94
  %v275 = vunpack.c.h.bf16 %v94
  %v276 = vunpack.c.l.bf16 %v95
  %v277 = vunpack.c.h.bf16 %v95
  %v278 = vunpack.c.l.bf16 %v96
  %v279 = vunpack.c.h.bf16 %v96
  %v280 = vunpack.c.l.bf16 %v97
  %v281 = vunpack.c.h.bf16 %v97
  %v282 = vunpack.c.l.bf16 %v98
  %v283 = vunpack.c.h.bf16 %v98
  %v284 = vunpack.c.l.bf16 %v99
  %v285 = vunpack.c.h.bf16 %v99
  %v286 = vunpack.c.l.bf16 %v100
  %v287 = vunpack.c.h.bf16 %v100
  %v288 = vunpack.c.l.bf16 %v101
  %v289 = vunpack.c.h.bf16 %v101
  %v290 = vunpack.c.l.bf16 %v102
  %v291 = vunpack.c.h.bf16 %v102
  %v292 = vunpack.c.l.bf16 %v103
  %v293 = vunpack.c.h.bf16 %v103
  %v294 = vunpack.c.l.bf16 %v104
  %v295 = vunpack.c.h.bf16 %v104
  %v296 = vunpack.c.l.bf16 %v105
  %v297 = vunpack.c.h.bf16 %v105
  %v298 = vunpack.c.l.bf16 %v106
  %v299 = vunpack.c.h.bf16 %v106
  %v300 = vunpack.c.l.bf16 %v107
  %v301 = vunpack.c.h.bf16 %v107
  %v302 = vunpack.c.l.bf16 %v108
  %v303 = vunpack.c.h.bf16 %v108
  %v304 = vunpack.c.l.bf16 %v109
  %v305 = vunpack.c.h.bf16 %v109
  %v306 = vunpack.c.l.bf16 %v110
  %v307 = vunpack.c.h.bf16 %v110
  %v308 = vunpack.c.l.bf16 %v111
  %v309 = vunpack.c.h.bf16 %v111
  %v310 = vunpack.c.l.bf16 %v112
  %v311 = vunpack.c.h.bf16 %v112
  %v312 = vunpack.c.l.bf16 %v113
  %v313 = vunpack.c.h.bf16 %v113
  %v314 = vunpack.c.l.bf16 %v114
  %v315 = vunpack.c.h.bf16 %v114
  %v316 = vunpack.c.l.bf16 %v115
  %v317 = vunpack.c.h.bf16 %v115
  %v318 = vunpack.c.l.bf16 %v116
  %v319 = vunpack.c.h.bf16 %v116
  %v320 = vunpack.c.l.bf16 %v117
  %v321 = vunpack.c.h.bf16 %v117
  %v322 = vunpack.c.l.bf16 %v118
  %v323 = vunpack.c.h.bf16 %v118
  %v324 = vunpack.c.l.bf16 %v119
  %v325 = vunpack.c.h.bf16 %v119
  %v326 = vunpack.c.l.bf16 %v120
  %v327 = vunpack.c.h.bf16 %v120
  %v328 = vunpack.c.l.bf16 %v121
  %v329 = vunpack.c.h.bf16 %v121
  %v330 = vunpack.c.l.bf16 %v122
  %v331 = vunpack.c.h.bf16 %v122
  %v332 = vunpack.c.l.bf16 %v123
  %v333 = vunpack.c.h.bf16 %v123
  %v334 = vunpack.c.l.bf16 %v124
  %v335 = vunpack.c.h.bf16 %v124
  %v336 = vunpack.c.l.bf16 %v125
  %v337 = vunpack.c.h.bf16 %v125
  %v338 = vunpack.c.l.bf16 %v126
  %v339 = vunpack.c.h.bf16 %v126
  %v340 = vunpack.c.l.bf16 %v127
  %v341 = vunpack.c.h.bf16 %v127
  %v342 = vunpack.c.l.bf16 %v128
  %v343 = vunpack.c.h.bf16 %v128
  %v344 = vunpack.c.l.bf16 %v129
  %v345 = vunpack.c.h.bf16 %v129
  %v346 = vunpack.c.l.bf16 %v130
  %v347 = vunpack.c.h.bf16 %v130
  %v348 = vunpack.c.l.bf16 %v131
  %v349 = vunpack.c.h.bf16 %v131
  %v350 = vunpack.c.l.bf16 %v132
  %v351 = vunpack.c.h.bf16 %v132
  %v352 = vunpack.c.l.bf16 %v133
  %v353 = vunpack.c.h.bf16 %v133
  %v354 = vunpack.c.l.bf16 %v134
  %v355 = vunpack.c.h.bf16 %v134
  %v356 = vunpack.c.l.bf16 %v135
  %v357 = vunpack.c.h.bf16 %v135
  %v358 = vunpack.c.l.bf16 %v136
  %v359 = vunpack.c.h.bf16 %v136
  %v360 = vunpack.c.l.bf16 %v137
  %v361 = vunpack.c.h.bf16 %v137
  %v362 = vunpack.c.l.bf16 %v138
  %v363 = vunpack.c.h.bf16 %v138
  %v364 = vunpack.c.l.bf16 %v139
  %v365 = vunpack.c.h.bf16 %v139
  %v366 = vunpack.c.l.bf16 %v140
  %v367 = vunpack.c.h.bf16 %v140
  %v368 = vunpack.c.l.bf16 %v141
  %v369 = vunpack.c.h.bf16 %v141
  %v370 = vunpack.c.l.bf16 %v142
  %v371 = vunpack.c.h.bf16 %v142
  %v372 = vunpack.c.l.bf16 %v143
  %v373 = vunpack.c.h.bf16 %v143
  %v374 = vunpack.c.l.bf16 %v144
  %v375 = vunpack.c.h.bf16 %v144
  %v376 = vunpack.c.l.bf16 %v145
  %v377 = vunpack.c.h.bf16 %v145
  %v378 = vunpack.c.l.bf16 %v146
  %v379 = vunpack.c.h.bf16 %v146
  %v380 = vunpack.c.l.bf16 %v147
  %v381 = vunpack.c.h.bf16 %v147
  %v382 = vunpack.c.l.bf16 %v148
  %v383 = vunpack.c.h.bf16 %v148
  %v384 = vunpack.c.l.bf16 %v149
  %v385 = vunpack.c.h.bf16 %v149
  %v386 = vunpack.c.l.bf16 %v150
  %v387 = vunpack.c.h.bf16 %v150
  %v388 = vunpack.c.l.bf16 %v151
  %v389 = vunpack.c.h.bf16 %v151
  %v390 = vunpack.c.l.bf16 %v152
  %v391 = vunpack.c.h.bf16 %v152
  %v392 = vunpack.c.l.bf16 %v153
  %v393 = vunpack.c.h.bf16 %v153
  %v394 = vunpack.c.l.bf16 %v154
  %v395 = vunpack.c.h.bf16 %v154
  %v396 = vunpack.c.l.bf16 %v155
  %v397 = vunpack.c.h.bf16 %v155
  %v398 = vunpack.c.l.bf16 %v156
  %v399 = vunpack.c.h.bf16 %v156
  %v400 = vunpack.c.l.bf16 %v157
  %v401 = vunpack.c.h.bf16 %v157
  %v402 = vunpack.c.l.bf16 %v158
  %v403 = vunpack.c.h.bf16 %v158
  %v404 = vunpack.c.l.bf16 %v159
  %v405 = vunpack.c.h.bf16 %v159
  %v406 = vunpack.c.l.bf16 %v160
  %v407 = vunpack.c.h.bf16 %v160
  %v408 = vunpack.c.l.bf16 %v161
  %v409 = vunpack.c.h.bf16 %v161
  %v410 = vunpack.c.l.bf16 %v162
  %v411 = vunpack.c.h.bf16 %v162
  %v412 = vunpack.c.l.bf16 %v163
  %v413 = vunpack.c.h.bf16 %v163
  %v414 = vunpack.c.l.bf16 %v164
  %v415 = vunpack.c.h.bf16 %v164
  %v416 = vunpack.c.l.bf16 %v165
  %v417 = vunpack.c.h.bf16 %v165
  %v418 = vunpack.c.l.bf16 %v166
  %v419 = vunpack.c.h.bf16 %v166
  %v420 = vunpack.c.l.bf16 %v167
  %v421 = vunpack.c.h.bf16 %v167
  %v422 = vunpack.c.l.bf16 %v168
  %v423 = vunpack.c.h.bf16 %v168
  %v424 = vunpack.c.l.bf16 %v169
  %v425 = vunpack.c.h.bf16 %v169
  %v426 = vld [vmem:[%s2] sm:$0x3]
  %v428 = vlaneseq
  %v429 = vshrl.u32 %v428, 7
  %v430 = vsub.s32 0, %v429
  %v431 = vrot.slane %v426, %v430
  %v432 = vlaneseq
  %v433 = vshrl.u32 %v432, 7
  %v434 = vsub.s32 1, %v433
  %v435 = vrot.slane %v426, %v434
  %438 = vmatprep.subr.mxu0 %v171
  %439 = vmatpush1.msra.mxu0 %v170
  %440 = vmatprep.subr.mxu0 %v173
  %441 = vmatpush1.msra.mxu0 %v172
  %442 = vmatprep.subr.mxu0 %v175
  %443 = vmatpush1.msra.mxu0 %v174
  %444 = vmatprep.subr.mxu0 %v177
  %445 = vmatpush1.msra.mxu0 %v176
  %446 = vmatprep.subr.mxu0 %v179
  %447 = vmatpush1.msra.mxu0 %v178
  %448 = vmatprep.subr.mxu0 %v181
  %449 = vmatpush1.msra.mxu0 %v180
  %450 = vmatprep.subr.mxu0 %v183
  %451 = vmatpush1.msra.mxu0 %v182
  %452 = vmatprep.subr.mxu0 %v185
  %453 = vmatpush1.msra.mxu0 %v184
  %454 = vmatprep.subr.mxu0 %v187
  %455 = vmatpush1.msra.mxu0 %v186
  %456 = vmatprep.subr.mxu0 %v189
  %457 = vmatpush1.msra.mxu0 %v188
  %458 = vmatprep.subr.mxu0 %v191
  %459 = vmatpush1.msra.mxu0 %v190
  %460 = vmatprep.subr.mxu0 %v193
  %461 = vmatpush1.msra.mxu0 %v192
  %462 = vmatprep.subr.mxu0 %v195
  %463 = vmatpush1.msra.mxu0 %v194
  %464 = vmatprep.subr.mxu0 %v197
  %465 = vmatpush1.msra.mxu0 %v196
  %466 = vmatprep.subr.mxu0 %v199
  %467 = vmatpush1.msra.mxu0 %v198
  %468 = vmatprep.subr.mxu0 %v201
  %469 = vmatpush1.msra.mxu0 %v200
  %470 = vmatprep.subr.mxu0 %v203
  %471 = vmatpush1.msra.mxu0 %v202
  %472 = vmatprep.subr.mxu0 %v205
  %473 = vmatpush1.msra.mxu0 %v204
  %474 = vmatprep.subr.mxu0 %v207
  %475 = vmatpush1.msra.mxu0 %v206
  %476 = vmatprep.subr.mxu0 %v209
  %477 = vmatpush1.msra.mxu0 %v208
  %478 = vmatprep.subr.mxu0 %v211
  %479 = vmatpush1.msra.mxu0 %v210
  %480 = vmatprep.subr.mxu0 %v213
  %481 = vmatpush1.msra.mxu0 %v212
  %482 = vmatprep.subr.mxu0 %v215
  %483 = vmatpush1.msra.mxu0 %v214
  %484 = vmatprep.subr.mxu0 %v217
  %485 = vmatpush1.msra.mxu0 %v216
  %486 = vmatprep.subr.mxu0 %v219
  %487 = vmatpush1.msra.mxu0 %v218
  %488 = vmatprep.subr.mxu0 %v221
  %489 = vmatpush1.msra.mxu0 %v220
  %490 = vmatprep.subr.mxu0 %v223
  %491 = vmatpush1.msra.mxu0 %v222
  %492 = vmatprep.subr.mxu0 %v225
  %493 = vmatpush1.msra.mxu0 %v224
  %494 = vmatprep.subr.mxu0 %v227
  %495 = vmatpush1.msra.mxu0 %v226
  %496 = vmatprep.subr.mxu0 %v229
  %497 = vmatpush1.msra.mxu0 %v228
  %498 = vmatprep.subr.mxu0 %v231
  %499 = vmatpush1.msra.mxu0 %v230
  %500 = vmatprep.subr.mxu0 %v233
  %501 = vmatpush1.msra.mxu0 %v232
  %502 = vmatprep.mubr.f32.mxu0 %v35
  %503 = vmatmul.mubr.f32.gmra.mrb[0].mxu0 %v34
  %v504 = vpop.f32.mrb[0].mxu0
  %v505 = vadd.f32 %v431, %v504
  %v506 = vpop.f32.mrb[0].mxu0
  %v507 = vadd.f32 %v435, %v506
  %508 = vdwg.mxu0
  %509 = vmatprep.subr.mxu0 %v235
  %510 = vmatpush1.msra.mxu0 %v234
  %511 = vmatprep.subr.mxu0 %v237
  %512 = vmatpush1.msra.mxu0 %v236
  %513 = vmatprep.subr.mxu0 %v239
  %514 = vmatpush1.msra.mxu0 %v238
  %515 = vmatprep.subr.mxu0 %v241
  %516 = vmatpush1.msra.mxu0 %v240
  %517 = vmatprep.subr.mxu0 %v243
  %518 = vmatpush1.msra.mxu0 %v242
  %519 = vmatprep.subr.mxu0 %v245
  %520 = vmatpush1.msra.mxu0 %v244
  %521 = vmatprep.subr.mxu0 %v247
  %522 = vmatpush1.msra.mxu0 %v246
  %523 = vmatprep.subr.mxu0 %v249
  %524 = vmatpush1.msra.mxu0 %v248
  %525 = vmatprep.subr.mxu0 %v251
  %526 = vmatpush1.msra.mxu0 %v250
  %527 = vmatprep.subr.mxu0 %v253
  %528 = vmatpush1.msra.mxu0 %v252
  %529 = vmatprep.subr.mxu0 %v255
  %530 = vmatpush1.msra.mxu0 %v254
  %531 = vmatprep.subr.mxu0 %v257
  %532 = vmatpush1.msra.mxu0 %v256
  %533 = vmatprep.subr.mxu0 %v259
  %534 = vmatpush1.msra.mxu0 %v258
  %535 = vmatprep.subr.mxu0 %v261
  %536 = vmatpush1.msra.mxu0 %v260
  %537 = vmatprep.subr.mxu0 %v263
  %538 = vmatpush1.msra.mxu0 %v262
  %539 = vmatprep.subr.mxu0 %v265
  %540 = vmatpush1.msra.mxu0 %v264
  %541 = vmatprep.subr.mxu0 %v267
  %542 = vmatpush1.msra.mxu0 %v266
  %543 = vmatprep.subr.mxu0 %v269
  %544 = vmatpush1.msra.mxu0 %v268
  %545 = vmatprep.subr.mxu0 %v271
  %546 = vmatpush1.msra.mxu0 %v270
  %547 = vmatprep.subr.mxu0 %v273
  %548 = vmatpush1.msra.mxu0 %v272
  %549 = vmatprep.subr.mxu0 %v275
  %550 = vmatpush1.msra.mxu0 %v274
  %551 = vmatprep.subr.mxu0 %v277
  %552 = vmatpush1.msra.mxu0 %v276
  %553 = vmatprep.subr.mxu0 %v279
  %554 = vmatpush1.msra.mxu0 %v278
  %555 = vmatprep.subr.mxu0 %v281
  %556 = vmatpush1.msra.mxu0 %v280
  %557 = vmatprep.subr.mxu0 %v283
  %558 = vmatpush1.msra.mxu0 %v282
  %559 = vmatprep.subr.mxu0 %v285
  %560 = vmatpush1.msra.mxu0 %v284
  %561 = vmatprep.subr.mxu0 %v287
  %562 = vmatpush1.msra.mxu0 %v286
  %563 = vmatprep.subr.mxu0 %v289
  %564 = vmatpush1.msra.mxu0 %v288
  %565 = vmatprep.subr.mxu0 %v291
  %566 = vmatpush1.msra.mxu0 %v290
  %567 = vmatprep.subr.mxu0 %v293
  %568 = vmatpush1.msra.mxu0 %v292
  %569 = vmatprep.subr.mxu0 %v295
  %570 = vmatpush1.msra.mxu0 %v294
  %571 = vmatprep.subr.mxu0 %v297
  %572 = vmatpush1.msra.mxu0 %v296
  %573 = vmatprep.mubr.f32.mxu0 %v37
  %574 = vmatmul.mubr.f32.gmra.mrb[0].mxu0 %v36
  %v575 = vpop.f32.mrb[0].mxu0
  %v576 = vadd.f32 %v505, %v575
  %v577 = vpop.f32.mrb[0].mxu0
  %v578 = vadd.f32 %v507, %v577
  %579 = vdwg.mxu0
  %580 = vmatprep.subr.mxu0 %v299
  %581 = vmatpush1.msra.mxu0 %v298
  %582 = vmatprep.subr.mxu0 %v301
  %583 = vmatpush1.msra.mxu0 %v300
  %584 = vmatprep.subr.mxu0 %v303
  %585 = vmatpush1.msra.mxu0 %v302
  %586 = vmatprep.subr.mxu0 %v305
  %587 = vmatpush1.msra.mxu0 %v304
  %588 = vmatprep.subr.mxu0 %v307
  %589 = vmatpush1.msra.mxu0 %v306
  %590 = vmatprep.subr.mxu0 %v309
  %591 = vmatpush1.msra.mxu0 %v308
  %592 = vmatprep.subr.mxu0 %v311
  %593 = vmatpush1.msra.mxu0 %v310
  %594 = vmatprep.subr.mxu0 %v313
  %595 = vmatpush1.msra.mxu0 %v312
  %596 = vmatprep.subr.mxu0 %v315
  %597 = vmatpush1.msra.mxu0 %v314
  %598 = vmatprep.subr.mxu0 %v317
  %599 = vmatpush1.msra.mxu0 %v316
  %600 = vmatprep.subr.mxu0 %v319
  %601 = vmatpush1.msra.mxu0 %v318
  %602 = vmatprep.subr.mxu0 %v321
  %603 = vmatpush1.msra.mxu0 %v320
  %604 = vmatprep.subr.mxu0 %v323
  %605 = vmatpush1.msra.mxu0 %v322
  %606 = vmatprep.subr.mxu0 %v325
  %607 = vmatpush1.msra.mxu0 %v324
  %608 = vmatprep.subr.mxu0 %v327
  %609 = vmatpush1.msra.mxu0 %v326
  %610 = vmatprep.subr.mxu0 %v329
  %611 = vmatpush1.msra.mxu0 %v328
  %612 = vmatprep.subr.mxu0 %v331
  %613 = vmatpush1.msra.mxu0 %v330
  %614 = vmatprep.subr.mxu0 %v333
  %615 = vmatpush1.msra.mxu0 %v332
  %616 = vmatprep.subr.mxu0 %v335
  %617 = vmatpush1.msra.mxu0 %v334
  %618 = vmatprep.subr.mxu0 %v337
  %619 = vmatpush1.msra.mxu0 %v336
  %620 = vmatprep.subr.mxu0 %v339
  %621 = vmatpush1.msra.mxu0 %v338
  %622 = vmatprep.subr.mxu0 %v341
  %623 = vmatpush1.msra.mxu0 %v340
  %624 = vmatprep.subr.mxu0 %v343
  %625 = vmatpush1.msra.mxu0 %v342
  %626 = vmatprep.subr.mxu0 %v345
  %627 = vmatpush1.msra.mxu0 %v344
  %628 = vmatprep.subr.mxu0 %v347
  %629 = vmatpush1.msra.mxu0 %v346
  %630 = vmatprep.subr.mxu0 %v349
  %631 = vmatpush1.msra.mxu0 %v348
  %632 = vmatprep.subr.mxu0 %v351
  %633 = vmatpush1.msra.mxu0 %v350
  %634 = vmatprep.subr.mxu0 %v353
  %635 = vmatpush1.msra.mxu0 %v352
  %636 = vmatprep.subr.mxu0 %v355
  %637 = vmatpush1.msra.mxu0 %v354
  %638 = vmatprep.subr.mxu0 %v357
  %639 = vmatpush1.msra.mxu0 %v356
  %640 = vmatprep.subr.mxu0 %v359
  %641 = vmatpush1.msra.mxu0 %v358
  %642 = vmatprep.subr.mxu0 %v361
  %643 = vmatpush1.msra.mxu0 %v360
  %644 = vmatprep.mubr.f32.mxu0 %v39
  %645 = vmatmul.mubr.f32.gmra.mrb[0].mxu0 %v38
  %v646 = vpop.f32.mrb[0].mxu0
  %v647 = vadd.f32 %v576, %v646
  %v648 = vpop.f32.mrb[0].mxu0
  %v649 = vadd.f32 %v578, %v648
  %650 = vdwg.mxu0
  %651 = vmatprep.subr.mxu0 %v363
  %652 = vmatpush1.msra.mxu0 %v362
  %653 = vmatprep.subr.mxu0 %v365
  %654 = vmatpush1.msra.mxu0 %v364
  %655 = vmatprep.subr.mxu0 %v367
  %656 = vmatpush1.msra.mxu0 %v366
  %657 = vmatprep.subr.mxu0 %v369
  %658 = vmatpush1.msra.mxu0 %v368
  %659 = vmatprep.subr.mxu0 %v371
  %660 = vmatpush1.msra.mxu0 %v370
  %661 = vmatprep.subr.mxu0 %v373
  %662 = vmatpush1.msra.mxu0 %v372
  %663 = vmatprep.subr.mxu0 %v375
  %664 = vmatpush1.msra.mxu0 %v374
  %665 = vmatprep.subr.mxu0 %v377
  %666 = vmatpush1.msra.mxu0 %v376
  %667 = vmatprep.subr.mxu0 %v379
  %668 = vmatpush1.msra.mxu0 %v378
  %669 = vmatprep.subr.mxu0 %v381
  %670 = vmatpush1.msra.mxu0 %v380
  %671 = vmatprep.subr.mxu0 %v383
  %672 = vmatpush1.msra.mxu0 %v382
  %673 = vmatprep.subr.mxu0 %v385
  %674 = vmatpush1.msra.mxu0 %v384
  %675 = vmatprep.subr.mxu0 %v387
  %676 = vmatpush1.msra.mxu0 %v386
  %677 = vmatprep.subr.mxu0 %v389
  %678 = vmatpush1.msra.mxu0 %v388
  %679 = vmatprep.subr.mxu0 %v391
  %680 = vmatpush1.msra.mxu0 %v390
  %681 = vmatprep.subr.mxu0 %v393
  %682 = vmatpush1.msra.mxu0 %v392
  %683 = vmatprep.subr.mxu0 %v395
  %684 = vmatpush1.msra.mxu0 %v394
  %685 = vmatprep.subr.mxu0 %v397
  %686 = vmatpush1.msra.mxu0 %v396
  %687 = vmatprep.subr.mxu0 %v399
  %688 = vmatpush1.msra.mxu0 %v398
  %689 = vmatprep.subr.mxu0 %v401
  %690 = vmatpush1.msra.mxu0 %v400
  %691 = vmatprep.subr.mxu0 %v403
  %692 = vmatpush1.msra.mxu0 %v402
  %693 = vmatprep.subr.mxu0 %v405
  %694 = vmatpush1.msra.mxu0 %v404
  %695 = vmatprep.subr.mxu0 %v407
  %696 = vmatpush1.msra.mxu0 %v406
  %697 = vmatprep.subr.mxu0 %v409
  %698 = vmatpush1.msra.mxu0 %v408
  %699 = vmatprep.subr.mxu0 %v411
  %700 = vmatpush1.msra.mxu0 %v410
  %701 = vmatprep.subr.mxu0 %v413
  %702 = vmatpush1.msra.mxu0 %v412
  %703 = vmatprep.subr.mxu0 %v415
  %704 = vmatpush1.msra.mxu0 %v414
  %705 = vmatprep.subr.mxu0 %v417
  %706 = vmatpush1.msra.mxu0 %v416
  %707 = vmatprep.subr.mxu0 %v419
  %708 = vmatpush1.msra.mxu0 %v418
  %709 = vmatprep.subr.mxu0 %v421
  %710 = vmatpush1.msra.mxu0 %v420
  %711 = vmatprep.subr.mxu0 %v423
  %712 = vmatpush1.msra.mxu0 %v422
  %713 = vmatprep.subr.mxu0 %v425
  %714 = vmatpush1.msra.mxu0 %v424
  %715 = vmatprep.mubr.f32.mxu0 %v41
  %716 = vmatmul.mubr.f32.gmra.mrb[0].mxu0 %v40
  %v717 = vpop.f32.mrb[0].mxu0
  %v718 = vadd.f32 %v647, %v717
  %v719 = vpop.f32.mrb[0].mxu0
  %v720 = vadd.f32 %v649, %v719
  %721 = vdwg.mxu0
  %v722 = vmax.f32 %v718, 0.0
  %v723 = vmax.f32 %v720, 0.0
  %v724 = vld [vmem:[%s3] sm:$0xf]
  %v725 = vld [vmem:[%s3 + $0x4] sm:$0xf]
  %v726 = vld [vmem:[%s3 + $0x8] sm:$0xf]
  %v727 = vld [vmem:[%s3 + $0xc] sm:$0xf]
  %v728 = vld [vmem:[%s3 + $0x10] sm:$0xf]
  %v729 = vld [vmem:[%s3 + $0x14] sm:$0xf]
  %v730 = vld [vmem:[%s3 + $0x18] sm:$0xf]
  %v731 = vld [vmem:[%s3 + $0x1c] sm:$0xf]
  %v732 = vld [vmem:[%s3 + $0x20] sm:$0xf]
  %v733 = vld [vmem:[%s3 + $0x24] sm:$0xf]
  %v734 = vld [vmem:[%s3 + $0x28] sm:$0xf]
  %v735 = vld [vmem:[%s3 + $0x2c] sm:$0xf]
  %v736 = vld [vmem:[%s3 + $0x30] sm:$0xf]
  %v737 = vld [vmem:[%s3 + $0x34] sm:$0xf]
  %v738 = vld [vmem:[%s3 + $0x38] sm:$0xf]
  %v739 = vld [vmem:[%s3 + $0x3c] sm:$0xf]
  %v740 = vld [vmem:[%s3 + $0x40] sm:$0xf]
  %v741 = vld [vmem:[%s3 + $0x44] sm:$0xf]
  %v742 = vld [vmem:[%s3 + $0x48] sm:$0xf]
  %v743 = vld [vmem:[%s3 + $0x4c] sm:$0xf]
  %v744 = vld [vmem:[%s3 + $0x50] sm:$0xf]
  %v745 = vld [vmem:[%s3 + $0x54] sm:$0xf]
  %v746 = vld [vmem:[%s3 + $0x58] sm:$0xf]
  %v747 = vld [vmem:[%s3 + $0x5c] sm:$0xf]
  %v748 = vld [vmem:[%s3 + $0x60] sm:$0xf]
  %v749 = vld [vmem:[%s3 + $0x64] sm:$0xf]
  %v750 = vld [vmem:[%s3 + $0x68] sm:$0xf]
  %v751 = vld [vmem:[%s3 + $0x6c] sm:$0xf]
  %v752 = vld [vmem:[%s3 + $0x70] sm:$0xf]
  %v753 = vld [vmem:[%s3 + $0x74] sm:$0xf]
  %v754 = vld [vmem:[%s3 + $0x78] sm:$0xf]
  %v755 = vld [vmem:[%s3 + $0x7c] sm:$0xf]
  %v756 = vunpack.c.l.bf16 %v724
  %v757 = vunpack.c.l.bf16 %v725
  %v758 = vunpack.c.l.bf16 %v726
  %v759 = vunpack.c.l.bf16 %v727
  %v760 = vunpack.c.l.bf16 %v728
  %v761 = vunpack.c.l.bf16 %v729
  %v762 = vunpack.c.l.bf16 %v730
  %v763 = vunpack.c.l.bf16 %v731
  %v764 = vunpack.c.l.bf16 %v732
  %v765 = vunpack.c.l.bf16 %v733
  %v766 = vunpack.c.l.bf16 %v734
  %v767 = vunpack.c.l.bf16 %v735
  %v768 = vunpack.c.l.bf16 %v736
  %v769 = vunpack.c.l.bf16 %v737
  %v770 = vunpack.c.l.bf16 %v738
  %v771 = vunpack.c.l.bf16 %v739
  %v772 = vunpack.c.l.bf16 %v740
  %v773 = vunpack.c.l.bf16 %v741
  %v774 = vunpack.c.l.bf16 %v742
  %v775 = vunpack.c.l.bf16 %v743
  %v776 = vunpack.c.l.bf16 %v744
  %v777 = vunpack.c.l.bf16 %v745
  %v778 = vunpack.c.l.bf16 %v746
  %v779 = vunpack.c.l.bf16 %v747
  %v780 = vunpack.c.l.bf16 %v748
  %v781 = vunpack.c.l.bf16 %v749
  %v782 = vunpack.c.l.bf16 %v750
  %v783 = vunpack.c.l.bf16 %v751
  %v784 = vunpack.c.l.bf16 %v752
  %v785 = vunpack.c.l.bf16 %v753
  %v786 = vunpack.c.l.bf16 %v754
  %v787 = vunpack.c.l.bf16 %v755
  %v788 = vld [vmem:[%s4] sm:$0x1]
  %v790 = vlaneseq
  %v791 = vshrl.u32 %v790, 7
  %v792 = vsub.s32 0, %v791
  %v793 = vrot.slane %v788, %v792
  %795 = vmatprep.subr.mxu0 0.0
  %796 = vmatpush1.msra.mxu0 %v756
  %797 = vmatprep.subr.mxu0 0.0
  %798 = vmatpush1.msra.mxu0 %v757
  %799 = vmatprep.subr.mxu0 0.0
  %800 = vmatpush1.msra.mxu0 %v758
  %801 = vmatprep.subr.mxu0 0.0
  %802 = vmatpush1.msra.mxu0 %v759
  %803 = vmatprep.subr.mxu0 0.0
  %804 = vmatpush1.msra.mxu0 %v760
  %805 = vmatprep.subr.mxu0 0.0
  %806 = vmatpush1.msra.mxu0 %v761
  %807 = vmatprep.subr.mxu0 0.0
  %808 = vmatpush1.msra.mxu0 %v762
  %809 = vmatprep.subr.mxu0 0.0
  %810 = vmatpush1.msra.mxu0 %v763
  %811 = vmatprep.subr.mxu0 0.0
  %812 = vmatpush1.msra.mxu0 %v764
  %813 = vmatprep.subr.mxu0 0.0
  %814 = vmatpush1.msra.mxu0 %v765
  %815 = vmatprep.subr.mxu0 0.0
  %816 = vmatpush1.msra.mxu0 %v766
  %817 = vmatprep.subr.mxu0 0.0
  %818 = vmatpush1.msra.mxu0 %v767
  %819 = vmatprep.subr.mxu0 0.0
  %820 = vmatpush1.msra.mxu0 %v768
  %821 = vmatprep.subr.mxu0 0.0
  %822 = vmatpush1.msra.mxu0 %v769
  %823 = vmatprep.subr.mxu0 0.0
  %824 = vmatpush1.msra.mxu0 %v770
  %825 = vmatprep.subr.mxu0 0.0
  %826 = vmatpush1.msra.mxu0 %v771
  %827 = vmatprep.subr.mxu0 0.0
  %828 = vmatpush1.msra.mxu0 %v772
  %829 = vmatprep.subr.mxu0 0.0
  %830 = vmatpush1.msra.mxu0 %v773
  %831 = vmatprep.subr.mxu0 0.0
  %832 = vmatpush1.msra.mxu0 %v774
  %833 = vmatprep.subr.mxu0 0.0
  %834 = vmatpush1.msra.mxu0 %v775
  %835 = vmatprep.subr.mxu0 0.0
  %836 = vmatpush1.msra.mxu0 %v776
  %837 = vmatprep.subr.mxu0 0.0
  %838 = vmatpush1.msra.mxu0 %v777
  %839 = vmatprep.subr.mxu0 0.0
  %840 = vmatpush1.msra.mxu0 %v778
  %841 = vmatprep.subr.mxu0 0.0
  %842 = vmatpush1.msra.mxu0 %v779
  %843 = vmatprep.subr.mxu0 0.0
  %844 = vmatpush1.msra.mxu0 %v780
  %845 = vmatprep.subr.mxu0 0.0
  %846 = vmatpush1.msra.mxu0 %v781
  %847 = vmatprep.subr.mxu0 0.0
  %848 = vmatpush1.msra.mxu0 %v782
  %849 = vmatprep.subr.mxu0 0.0
  %850 = vmatpush1.msra.mxu0 %v783
  %851 = vmatprep.subr.mxu0 0.0
  %852 = vmatpush1.msra.mxu0 %v784
  %853 = vmatprep.subr.mxu0 0.0
  %854 = vmatpush1.msra.mxu0 %v785
  %855 = vmatprep.subr.mxu0 0.0
  %856 = vmatpush1.msra.mxu0 %v786
  %857 = vmatprep.subr.mxu0 0.0
  %858 = vmatpush1.msra.mxu0 %v787
  %859 = vmatprep.mubr.f32.mxu0 %v723
  %860 = vmatmul.mubr.f32.gmra.mrb[0].mxu0 %v722
  %v861 = vpop.f32.mrb[0].mxu0
  %v862 = vadd.f32 %v793, %v861
  %v863 = vpop.f32.mrb[0].mxu0
  %864 = vdwg.mxu0
  %v865 = vmax.f32 %v862, 0.0
  %v866 = vld [vmem:[%s5] sm:$0xf]
  %v867 = vld [vmem:[%s5 + $0x4] sm:$0xf]
  %v868 = vld [vmem:[%s5 + $0x8] sm:$0xf]
  %v869 = vld [vmem:[%s5 + $0xc] sm:$0xf]
  %v870 = vld [vmem:[%s5 + $0x10] sm:$0xf]
  %v871 = vld [vmem:[%s5 + $0x14] sm:$0xf]
  %v872 = vld [vmem:[%s5 + $0x18] sm:$0xf]
  %v873 = vld [vmem:[%s5 + $0x1c] sm:$0xf]
  %v874 = vld [vmem:[%s5 + $0x20] sm:$0xf]
  %v875 = vld [vmem:[%s5 + $0x24] sm:$0xf]
  %v876 = vld [vmem:[%s5 + $0x28] sm:$0xf]
  %v877 = vld [vmem:[%s5 + $0x2c] sm:$0xf]
  %v878 = vld [vmem:[%s5 + $0x30] sm:$0xf]
  %v879 = vld [vmem:[%s5 + $0x34] sm:$0xf]
  %v880 = vld [vmem:[%s5 + $0x38] sm:$0xf]
  %v881 = vld [vmem:[%s5 + $0x3c] sm:$0xf]
  %v882 = vunpack.c.l.bf16 %v866
  %v883 = vunpack.c.l.bf16 %v867
  %v884 = vunpack.c.l.bf16 %v868
  %v885 = vunpack.c.l.bf16 %v869
  %v886 = vunpack.c.l.bf16 %v870
  %v887 = vunpack.c.l.bf16 %v871
  %v888 = vunpack.c.l.bf16 %v872
  %v889 = vunpack.c.l.bf16 %v873
  %v890 = vunpack.c.l.bf16 %v874
  %v891 = vunpack.c.l.bf16 %v875
  %v892 = vunpack.c.l.bf16 %v876
  %v893 = vunpack.c.l.bf16 %v877
  %v894 = vunpack.c.l.bf16 %v878
  %v895 = vunpack.c.l.bf16 %v879
  %v896 = vunpack.c.l.bf16 %v880
  %v897 = vunpack.c.l.bf16 %v881
  %v898 = vld [vmem:[%s6] sm:$0x1]
  %v900 = vlaneseq
  %v901 = vshrl.u32 %v900, 7
  %v902 = vsub.s32 0, %v901
  %v903 = vrot.slane %v898, %v902
  %905 = vmatprep.subr.mxu0 0.0
  %906 = vmatpush1.msra.mxu0 %v882
  %907 = vmatprep.subr.mxu0 0.0
  %908 = vmatpush1.msra.mxu0 %v883
  %909 = vmatprep.subr.mxu0 0.0
  %910 = vmatpush1.msra.mxu0 %v884
  %911 = vmatprep.subr.mxu0 0.0
  %912 = vmatpush1.msra.mxu0 %v885
  %913 = vmatprep.subr.mxu0 0.0
  %914 = vmatpush1.msra.mxu0 %v886
  %915 = vmatprep.subr.mxu0 0.0
  %916 = vmatpush1.msra.mxu0 %v887
  %917 = vmatprep.subr.mxu0 0.0
  %918 = vmatpush1.msra.mxu0 %v888
  %919 = vmatprep.subr.mxu0 0.0
  %920 = vmatpush1.msra.mxu0 %v889
  %921 = vmatprep.subr.mxu0 0.0
  %922 = vmatpush1.msra.mxu0 %v890
  %923 = vmatprep.subr.mxu0 0.0
  %924 = vmatpush1.msra.mxu0 %v891
  %925 = vmatprep.subr.mxu0 0.0
  %926 = vmatpush1.msra.mxu0 %v892
  %927 = vmatprep.subr.mxu0 0.0
  %928 = vmatpush1.msra.mxu0 %v893
  %929 = vmatprep.subr.mxu0 0.0
  %930 = vmatpush1.msra.mxu0 %v894
  %931 = vmatprep.subr.mxu0 0.0
  %932 = vmatpush1.msra.mxu0 %v895
  %933 = vmatprep.subr.mxu0 0.0
  %934 = vmatpush1.msra.mxu0 %v896
  %935 = vmatprep.subr.mxu0 0.0
  %936 = vmatpush1.msra.mxu0 %v897
  %937 = vmatprep.subr.mxu0 0.0
  %938 = vmatpush1.msra.mxu0 0.0
  %939 = vmatprep.subr.mxu0 0.0
  %940 = vmatpush1.msra.mxu0 0.0
  %941 = vmatprep.subr.mxu0 0.0
  %942 = vmatpush1.msra.mxu0 0.0
  %943 = vmatprep.subr.mxu0 0.0
  %944 = vmatpush1.msra.mxu0 0.0
  %945 = vmatprep.subr.mxu0 0.0
  %946 = vmatpush1.msra.mxu0 0.0
  %947 = vmatprep.subr.mxu0 0.0
  %948 = vmatpush1.msra.mxu0 0.0
  %949 = vmatprep.subr.mxu0 0.0
  %950 = vmatpush1.msra.mxu0 0.0
  %951 = vmatprep.subr.mxu0 0.0
  %952 = vmatpush1.msra.mxu0 0.0
  %953 = vmatprep.subr.mxu0 0.0
  %954 = vmatpush1.msra.mxu0 0.0
  %955 = vmatprep.subr.mxu0 0.0
  %956 = vmatpush1.msra.mxu0 0.0
  %957 = vmatprep.subr.mxu0 0.0
  %958 = vmatpush1.msra.mxu0 0.0
  %959 = vmatprep.subr.mxu0 0.0
  %960 = vmatpush1.msra.mxu0 0.0
  %961 = vmatprep.subr.mxu0 0.0
  %962 = vmatpush1.msra.mxu0 0.0
  %963 = vmatprep.subr.mxu0 0.0
  %964 = vmatpush1.msra.mxu0 0.0
  %965 = vmatprep.subr.mxu0 0.0
  %966 = vmatpush1.msra.mxu0 0.0
  %967 = vmatprep.subr.mxu0 0.0
  %968 = vmatpush1.msra.mxu0 0.0
  %969 = vmatprep.mubr.f32.mxu0 0.0
  %970 = vmatmul.mubr.f32.gmra.mrb[0].mxu0 %v865
  %v971 = vpop.f32.mrb[0].mxu0
  %v972 = vadd.f32 %v903, %v971
  %v973 = vpop.f32.mrb[0].mxu0
  %974 = vdwg.mxu0
  %975 = vst [vmem:[%s7] sm:$0xff] %v972
  // Predicated region
  $region30: #{shape_predictor_head.1} parent=0 // pred_check
    _
  $region31: #{shape_predictor_head.1} parent=0 // pred_check_branch
    %977 = sbr.rel (0) target = $region33
  $region32: #{shape_predictor_head.1} parent=0 // pred_region
    _
  $region33: #{shape_predictor_head.1} parent=0 // pred_fallthru
    _
  // Predicated region
  $region34: #{shape_predictor_head.1} parent=0 // pred_check
    _
  $region35: #{shape_predictor_head.1} parent=0 // pred_check_branch
    %979 = sbr.rel (0) target = $region37
  $region36: #{shape_predictor_head.1} parent=0 // pred_region
    _
  $region37: #{shape_predictor_head.1} parent=0 // pred_fallthru
    _

</llo_original>
